<compile_context>
chip_gen: v5e
topology: v5e:2x2
jax: 0.10.0
libtpu: 0.0.40
codegen_flags: <defaults>
</compile_context>

<pallas_src>
import math

import jax
import jax.numpy as jnp
from jax.experimental import pallas as pl
from jax.experimental.pallas import tpu as pltpu


# ---------------- Pallas kernel ----------------

def _gcn_fused_kernel(nz_ref, a_ref, x_ref, w_ref, bias_ref, o_ref, acc_ref):
    """out[i-tile] = sum_k A_hat[i,k-tile] @ (X[k-tile] @ W) + bias, f32 accumulator."""
    i = pl.program_id(0)
    k = pl.program_id(1)

    @pl.when(k == 0)
    def _():
        acc_ref[...] = jnp.zeros_like(acc_ref)

    # Skip MXU work for all-zero adjacency blocks (block-sparse spmm).
    @pl.when(nz_ref[i, k] != 0)
    def _():
        # support block: X[k-tile] @ W on the MXU (bf16 in, f32 out).
        s = jnp.dot(x_ref[...], w_ref[...], preferred_element_type=jnp.float32)
        # second matmul: A_hat[i, k-tile] @ support_block, accumulated over k.
        acc_ref[...] += jnp.dot(a_ref[...], s.astype(a_ref.dtype),
                                preferred_element_type=jnp.float32)

    @pl.when(k == pl.num_programs(1) - 1)
    def _():
        o_ref[...] = (acc_ref[...] + bias_ref[...]).astype(o_ref.dtype)


# ---------------- wrapper ----------------

def _choose_tiles(n_nodes):
    # Row tile: as large as possible, but keep >= 2 row blocks so both v7x TCs get work.
    if n_nodes % 256 == 0 and n_nodes >= 512:
        tm = 256
    elif n_nodes % 128 == 0:
        tm = 128
    else:
        raise ValueError("n_nodes must be a multiple of 128 (pad the graph)")
    # Reduction tile over the node dimension.
    tk = 256 if n_nodes % 256 == 0 else 128
    return tm, tk


def graph_convolution_forward(adj_hat, x, weight, bias, *, out_dtype=jnp.float32):
    """GraphConvolution.forward: spmm(graph, x @ W) + bias, fused into one Pallas kernel."""
    n_nodes, in_f = x.shape
    in_f2, out_f = weight.shape
    assert in_f == in_f2, "x / weight feature mismatch"
    assert adj_hat.shape == (n_nodes, n_nodes), "adjacency must be (N, N)"
    assert n_nodes % 128 == 0, "node count must be a multiple of 128 (pad the graph)"

    tm, tk = _choose_tiles(n_nodes)
    n_i, n_k = n_nodes // tm, n_nodes // tk

    # bf16 MXU inputs (2x MXU throughput, half the HBM bytes for the dominant N x N adjacency);
    # accumulation stays f32 inside the kernel.
    a_bf = adj_hat.astype(jnp.bfloat16)
    x_bf = x.astype(jnp.bfloat16)
    w_bf = weight.astype(jnp.bfloat16)
    if bias is None:
        bias = jnp.zeros((out_f,), dtype=jnp.float32)
    bias2d = bias.astype(jnp.float32).reshape(1, out_f)

    # Per-(i,k) block-nonzero table, scalar-prefetched into SMEM (skip zero A_hat tiles).
    nz = (jnp.abs(adj_hat.reshape(n_i, tm, n_k, tk)).sum(axis=(1, 3)) > 0).astype(jnp.int32)

    # Explicit VMEM budget: double-buffered inputs/outputs + f32 accumulator, with headroom,
    # capped to remain within v7x's smaller VMEM.
    bf16, f32 = 2, 4
    tile_bytes = (2 * tm * tk * bf16          # A_hat tile (double-buffered)
                  + 2 * tk * in_f * bf16      # X tile
                  + 2 * in_f * out_f * bf16   # W (resident, full)
                  + 2 * out_f * f32           # bias
                  + 2 * tm * out_f * f32      # output tile
                  + tm * out_f * f32)         # f32 accumulator scratch
    vmem_limit = int(min(max(4 * tile_bytes, 16 * 1024 * 1024), 40 * 1024 * 1024))

    return pl.pallas_call(
        _gcn_fused_kernel,
        out_shape=jax.ShapeDtypeStruct((n_nodes, out_f), out_dtype),
        grid_spec=pltpu.PrefetchScalarGridSpec(
            num_scalar_prefetch=1,
            grid=(n_i, n_k),
            in_specs=[
                pl.BlockSpec((tm, tk), lambda i, k, nz_ref: (i, k)),        # A_hat tile
                pl.BlockSpec((tk, in_f), lambda i, k, nz_ref: (k, 0)),      # X rows for k-tile
                pl.BlockSpec((in_f, out_f), lambda i, k, nz_ref: (0, 0)),   # W (full, resident)
                pl.BlockSpec((1, out_f), lambda i, k, nz_ref: (0, 0)),      # bias
            ],
            out_specs=pl.BlockSpec((tm, out_f), lambda i, k, nz_ref: (i, 0)),
            scratch_shapes=[pltpu.VMEM((tm, out_f), jnp.float32)],
        ),
        compiler_params=pltpu.CompilerParams(
            dimension_semantics=("parallel", "arbitrary"),
            vmem_limit_bytes=vmem_limit),
    )(nz, a_bf, x_bf, w_bf, bias2d)


# ---------------- parameter / graph construction (glue) ----------------

def init_params(key, in_features, out_features):
    # Matches reset_parameters(): weight ~ U(-stdv, stdv), stdv = 1/sqrt(out_features); bias = 0
    stdv = 1.0 / math.sqrt(out_features)
    weight = jax.random.uniform(key, (in_features, out_features),
                                minval=-stdv, maxval=stdv, dtype=jnp.float32)
    bias = jnp.zeros((out_features,), dtype=jnp.float32)
    return weight, bias


def build_normalized_adjacency(key, n_nodes, p=0.05):
    # random symmetric graph + self loops, symmetric normalization D^{-1/2}(A+I)D^{-1/2}
    upper = jax.random.bernoulli(key, p, (n_nodes, n_nodes)).astype(jnp.float32)
    a = jnp.triu(upper, k=1)
    a = a + a.T + jnp.eye(n_nodes, dtype=jnp.float32)
    deg = jnp.sum(a, axis=1)
    d_inv_sqrt = 1.0 / jnp.sqrt(deg)
    return a * d_inv_sqrt[:, None] * d_inv_sqrt[None, :]


if __name__ == "__main__":
    key = jax.random.PRNGKey(0)
    k_x, k_w, k_g = jax.random.split(key, 3)

    N = 256            # number of graph nodes
    in_features = 128
    out_features = 128

    x = jax.random.normal(k_x, (N, in_features), dtype=jnp.float32)
    weight, bias = init_params(k_w, in_features, out_features)
    adj_hat = build_normalized_adjacency(k_g, N)

    out = graph_convolution_forward(adj_hat, x, weight, bias)
    out = jax.block_until_ready(out)

    # reference check in plain JAX (f32); bf16 MXU inputs -> looser tolerance
    ref = adj_hat @ (x @ weight) + bias
    assert out.shape == (N, out_features)
    assert jnp.allclose(out, ref, rtol=5e-2, atol=5e-2), "mismatch vs reference"

    print("KERNEL_OK")
</pallas_src>

<mosaic_0001>
module attributes {stable_mosaic.version = 11 : i64} {
  func.func @_gcn_fused_kernel(%arg0: i32, %arg1: i32, %arg2: memref<2x1xi32, #tpu.memory_space<smem>>, %arg3: memref<128x256xbf16, #tpu.memory_space<vmem>>, %arg4: memref<256x128xbf16, #tpu.memory_space<vmem>>, %arg5: memref<128x128xbf16, #tpu.memory_space<vmem>>, %arg6: memref<1x128xf32, #tpu.memory_space<vmem>>, %arg7: memref<128x128xf32, #tpu.memory_space<vmem>>, %arg8: memref<128x128xf32, #tpu.memory_space<vmem>>) attributes {dimension_semantics = [#tpu.dimension_semantics<parallel>, #tpu.dimension_semantics<arbitrary>], iteration_bounds = array<i64: 2, 1>, scalar_prefetch = 1 : i64, scratch_operands = 1 : i64, tpu.core_type = #tpu.core_type<tc>, window_params = [{transform_indices = @transform_0, window_bounds = array<i64: 128, 256>}, {transform_indices = @transform_1, window_bounds = array<i64: 256, 128>}, {pipeline_mode = #tpu.pipeline_mode<synchronous>, transform_indices = @transform_2, window_bounds = array<i64: 128, 128>}, {pipeline_mode = #tpu.pipeline_mode<synchronous>, transform_indices = @transform_3, window_bounds = array<i64: 1, 128>}, {transform_indices = @transform_4, window_bounds = array<i64: 128, 128>}]} {
    %c0_i32 = arith.constant 0 : i32
    %0 = arith.cmpi eq, %arg1, %c0_i32 : i32
    %1 = arith.extui %0 : i1 to i32
    %c0_i32_0 = arith.constant 0 : i32
    %2 = arith.cmpi ne, %1, %c0_i32_0 : i32
    scf.if %2 {
      %cst = arith.constant 0.000000e+00 : f32
      %12 = vector.broadcast %cst : f32 to vector<128x128xf32>
      %c0 = arith.constant 0 : index
      %c0_5 = arith.constant 0 : index
      %13 = vector.load %arg8[%c0, %c0_5] : memref<128x128xf32, #tpu.memory_space<vmem>>, vector<128x128xf32>
      tpu.vector_store %arg8[%c0, %c0_5], %12 {strides = array<i32>} : memref<128x128xf32, #tpu.memory_space<vmem>>, vector<128x128xf32>,
    } else {
    }
    %3 = arith.index_cast %arg0 : i32 to index
    %4 = arith.index_cast %arg1 : i32 to index
    %5 = memref.load %arg2[%3, %4] : memref<2x1xi32, #tpu.memory_space<smem>>
    %c0_i32_1 = arith.constant 0 : i32
    %6 = arith.cmpi ne, %5, %c0_i32_1 : i32
    %7 = arith.extui %6 : i1 to i32
    %c0_i32_2 = arith.constant 0 : i32
    %8 = arith.cmpi ne, %7, %c0_i32_2 : i32
    scf.if %8 {
      %c0 = arith.constant 0 : index
      %c0_5 = arith.constant 0 : index
      %12 = vector.load %arg4[%c0, %c0_5] : memref<256x128xbf16, #tpu.memory_space<vmem>>, vector<256x128xbf16>
      %c0_6 = arith.constant 0 : index
      %c0_7 = arith.constant 0 : index
      %13 = vector.load %arg5[%c0_6, %c0_7] : memref<128x128xbf16, #tpu.memory_space<vmem>>, vector<128x128xbf16>
      %cst = arith.constant dense<0.000000e+00> : vector<256x128xf32>
      %14 = tpu.matmul %12, %13, %cst {dimension_numbers = #tpu.dot_dimension_numbers<[1], [0], [0], [1], [0, 0, 1, 1], [], []>} : vector<256x128xbf16>, vector<128x128xbf16>, vector<256x128xf32> -> vector<256x128xf32>
      %c0_8 = arith.constant 0 : index
      %c0_9 = arith.constant 0 : index
      %15 = vector.load %arg8[%c0_8, %c0_9] : memref<128x128xf32, #tpu.memory_space<vmem>>, vector<128x128xf32>
      %c0_10 = arith.constant 0 : index
      %c0_11 = arith.constant 0 : index
      %16 = vector.load %arg3[%c0_10, %c0_11] : memref<128x256xbf16, #tpu.memory_space<vmem>>, vector<128x256xbf16>
      %17 = arith.truncf %14 : vector<256x128xf32> to vector<256x128xbf16>
      %cst_12 = arith.constant dense<0.000000e+00> : vector<128x128xf32>
      %18 = tpu.matmul %16, %17, %cst_12 {dimension_numbers = #tpu.dot_dimension_numbers<[1], [0], [0], [1], [0, 0, 1, 1], [], []>} : vector<128x256xbf16>, vector<256x128xbf16>, vector<128x128xf32> -> vector<128x128xf32>
      %19 = arith.addf %15, %18 : vector<128x128xf32>
      %c0_13 = arith.constant 0 : index
      %c0_14 = arith.constant 0 : index
      %20 = vector.load %arg8[%c0_13, %c0_14] : memref<128x128xf32, #tpu.memory_space<vmem>>, vector<128x128xf32>
      tpu.vector_store %arg8[%c0_13, %c0_14], %19 {strides = array<i32>} : memref<128x128xf32, #tpu.memory_space<vmem>>, vector<128x128xf32>,
    } else {
    }
    %c0_i32_3 = arith.constant 0 : i32
    %9 = arith.cmpi eq, %arg1, %c0_i32_3 : i32
    %10 = arith.extui %9 : i1 to i32
    %c0_i32_4 = arith.constant 0 : i32
    %11 = arith.cmpi ne, %10, %c0_i32_4 : i32
    scf.if %11 {
      %c0 = arith.constant 0 : index
      %c0_5 = arith.constant 0 : index
      %12 = vector.load %arg8[%c0, %c0_5] : memref<128x128xf32, #tpu.memory_space<vmem>>, vector<128x128xf32>
      %c0_6 = arith.constant 0 : index
      %c0_7 = arith.constant 0 : index
      %13 = vector.load %arg6[%c0_6, %c0_7] : memref<1x128xf32, #tpu.memory_space<vmem>>, vector<1x128xf32>
      %14 = vector.broadcast %13 : vector<1x128xf32> to vector<128x128xf32>
      %15 = arith.addf %12, %14 : vector<128x128xf32>
      %c0_8 = arith.constant 0 : index
      %c0_9 = arith.constant 0 : index
      %16 = vector.load %arg7[%c0_8, %c0_9] : memref<128x128xf32, #tpu.memory_space<vmem>>, vector<128x128xf32>
      tpu.vector_store %arg7[%c0_8, %c0_9], %15 {strides = array<i32>} : memref<128x128xf32, #tpu.memory_space<vmem>>, vector<128x128xf32>,
    } else {
    }
    return
  }
  func.func @transform_0(%arg0: i32, %arg1: i32, %arg2: memref<2x1xi32, #tpu.memory_space<smem>>) -> (i32, i32) {
    %c0_i32 = arith.constant 0 : i32
    return %arg0, %arg1 : i32, i32
  }
  func.func @transform_1(%arg0: i32, %arg1: i32, %arg2: memref<2x1xi32, #tpu.memory_space<smem>>) -> (i32, i32) {
    %c0_i32 = arith.constant 0 : i32
    %c0_i32_0 = arith.constant 0 : i32
    return %arg1, %c0_i32 : i32, i32
  }
  func.func @transform_2(%arg0: i32, %arg1: i32, %arg2: memref<2x1xi32, #tpu.memory_space<smem>>) -> (i32, i32) {
    %c0_i32 = arith.constant 0 : i32
    %c0_i32_0 = arith.constant 0 : i32
    %c0_i32_1 = arith.constant 0 : i32
    return %c0_i32, %c0_i32_0 : i32, i32
  }
  func.func @transform_3(%arg0: i32, %arg1: i32, %arg2: memref<2x1xi32, #tpu.memory_space<smem>>) -> (i32, i32) {
    %c0_i32 = arith.constant 0 : i32
    %c0_i32_0 = arith.constant 0 : i32
    %c0_i32_1 = arith.constant 0 : i32
    return %c0_i32, %c0_i32_0 : i32, i32
  }
  func.func @transform_4(%arg0: i32, %arg1: i32, %arg2: memref<2x1xi32, #tpu.memory_space<smem>>) -> (i32, i32) {
    %c0_i32 = arith.constant 0 : i32
    %c0_i32_0 = arith.constant 0 : i32
    return %arg0, %c0_i32 : i32, i32
  }
}

</mosaic_0001>

<llo_original>
// kernel: tpu_custom_call.1
$region0: #{tpu_custom_call.1}
  #allocation0 [shape = 'u32[]', space=smem, size = 0x4, offset = 0x4, fixed_abs, tag = 'smem constant byte address 0x4 - core index']
  #allocation1 [shape = 'u32[72,128]{1,0:T(1,128)}', space=vmem, size = 0x9000, scoped, tag = 'internal scratch']
  #allocation2 [shape = 'f32[128,128]{1,0:T(8,128)}', space=vmem, size = 0x10000, scoped, tag = 'scratch operand']
  #allocation3 [shape = 's32[1]{0}', space=sflag, size = 0x4, scoped, tag = 'scoped memory for tpu_custom_call.1']
  #allocation4 [shape = 'u8[1024]{0}', space=smem, size = 0x400, scoped, tag = 'prefetched SMEM operand 0']
  %s0 = inlined_call_operand.vmem [shape: s32[2,1], index: 0, kind: input, shape index: {}]
  %s1 = inlined_call_operand.hbm [shape: bf16[256,256], index: 1, kind: input, shape index: {}]
  %s2 = inlined_call_operand.hbm [shape: bf16[256,128], index: 2, kind: input, shape index: {}]
  %s3 = inlined_call_operand.hbm [shape: bf16[128,128], index: 3, kind: input, shape index: {}]
  %s4 = inlined_call_operand.vmem [shape: f32[1,128], index: 4, kind: input, shape index: {}]
  %s5 = inlined_call_operand.hbm [shape: f32[256,128], index: 5, kind: output, shape index: {}]
  %s6 = sld [smem:[#allocation0]]
  $region73: #{tpu_custom_call.1} parent=0
    _
  %s8 = ssub.s32 1, %s6
  %s9 = scalar_select 0, %s8, %s6
  %s11 = sshll.u32 %s0, 4
  %s12 = int_to_ptr.vmem [resolvable:$true] %s11
  %14 = dma.vmem_to_smem %s12, 32, [#allocation4], [#allocation3]
  %16 = dma.done [#allocation3], 32
  %17 = sfence
  $region1: #{tpu_custom_call.1} parent=0
    #allocation5 [shape = 'u8[131072]{0}', space=vmem, size = 0x20000, scoped, tag = 'input window, operand 1']
    #allocation6 [shape = 's32[2]{0}', space=sflag, size = 0x8, scoped, tag = 'scoped memory for tpu_custom_call.1']
    #allocation7 [shape = 's32[2]{0}', space=sflag, size = 0x8, scoped, tag = 'scoped memory for tpu_custom_call.1']
    #allocation8 [shape = 'u8[65536]{0}', space=vmem, size = 0x10000, scoped, tag = 'input window, operand 2, single buffered']
    #allocation9 [shape = 's32[1]{0}', space=sflag, size = 0x4, scoped, tag = 'scoped memory for tpu_custom_call.1']
    #allocation10 [shape = 'u8[32768]{0}', space=vmem, size = 0x8000, scoped, tag = 'input window, operand 3, single buffered']
    #allocation11 [shape = 'u8[131072]{0}', space=vmem, size = 0x20000, scoped, tag = 'output window, operand 0']
    %18 = vsyncpa [#allocation6], 0
    %s19 = scalar_lea.sflag [#allocation6], 1
    %20 = vsyncpa %s19, 0
    %21 = vsyncpa [#allocation9], 0
    %22 = vsyncpa [#allocation7], 0
    %s23 = scalar_lea.sflag [#allocation7], 1
    %24 = vsyncpa %s23, 0
    loop: start=0, step=1, limit=4
    $region2: #{tpu_custom_call.1} parent=1 // loop_pre_header
      _
    $region3: #{tpu_custom_call.1} parent=1 // loop_header
      %s26 = sphi 0, %s30
      %p27 = scmp.ge.s32.totalorder %s26, 4
      %s33 = sphi 0, %s45
      %s34 = sphi 0, %s41
      %s35 = sphi 0, %s33
      %s36 = sphi 0, %s34
      %s37 = sphi 0, %s35
      %s38 = sphi 0, %s36
      %s50 = sphi 0, %s52
      %s53 = sphi 0, %s50
      %s54 = sphi 0, %s53
      %s70 = sphi 0, %s54
      %s76 = sphi 0, %s78
      %s79 = sphi 0, %s76
      %s80 = sphi 0, %s79
      %s96 = sphi 0, %s80
      %s100 = sphi 0, %s100
      %s102 = sphi 0, %s100
      %s103 = sphi 0, %s102
      %s117 = sphi 0, %s103
      %s121 = sphi 0, %s121
      %s123 = sphi 0, %s121
      %s124 = sphi 0, %s123
      %s138 = sphi 0, %s124
      %s144 = sphi 0, %s146
      %s147 = sphi 0, %s144
      %s148 = sphi 0, %s147
      %s164 = sphi 0, %s148
    $region4: #{tpu_custom_call.1} parent=1 // loop_header_branch
      %29 = sbr.rel (%p27) target = $region8
    $region5: #{tpu_custom_call.1} parent=1 // loop_body
      %s31 = ssub.s32 %s26, 1
      %s32 = ssub.s32 %s26, 2
      %s39 = sadd.s32 1, %s34
      %p40 = scmp.ge.s32.totalorder %s39, 1
      %s41 = scalar_select %p40, 0, %s39
      %s42 = sadd.s32 1, %s33
      %s43 = scalar_select %p40, %s42, %s33
      %p44 = scmp.ge.s32.totalorder %s43, 2
      %s45 = scalar_select %p44, 0, %s43
      %s46 = ssub.s32 %s33, %s45
      %s47 = ssub.s32 %s34, %s41
      %s48 = sor.u32 %s46, %s47
      %p49 = scmp.eq.s32.totalorder %s48, 0
      %s51 = sadd.s32 %s50, 1
      %s52 = scalar_select %p49, %s50, %s51
      %p55 = pneg %p49
      %p56 = scmp.eq.s32.totalorder %s26, 1
      %p57 = por %p55, %p56
      %p58 = scmp.ne.s32.totalorder %s50, %s53
      %p59 = scmp.eq.s32.totalorder %s26, 0
      %p60 = por %p58, %p59
      %p61 = scmp.ne.s32.totalorder %s50, %s53
      %p62 = scmp.eq.s32.totalorder %s31, 1
      %p63 = por %p61, %p62
      %p64 = scmp.ne.s32.totalorder %s53, %s54
      %p65 = scmp.eq.s32.totalorder %s31, 0
      %p66 = por %p64, %p65
      %p67 = scmp.ne.s32.totalorder %s53, %s54
      %p68 = scmp.eq.s32.totalorder %s32, 1
      %p69 = por %p67, %p68
      %p71 = scmp.ne.s32.totalorder %s54, %s70
      %p72 = scmp.eq.s32.totalorder %s32, 0
      %p73 = por %p71, %p72
      %s74 = ssub.s32 %s34, %s41
      %p75 = scmp.eq.s32.totalorder %s74, 0
      %s77 = sadd.s32 %s76, 1
      %s78 = scalar_select %p75, %s76, %s77
      %p81 = pneg %p75
      %p82 = scmp.eq.s32.totalorder %s26, 1
      %p83 = por %p81, %p82
      %p84 = scmp.ne.s32.totalorder %s76, %s79
      %p85 = scmp.eq.s32.totalorder %s26, 0
      %p86 = por %p84, %p85
      %p87 = scmp.ne.s32.totalorder %s76, %s79
      %p88 = scmp.eq.s32.totalorder %s31, 1
      %p89 = por %p87, %p88
      %p90 = scmp.ne.s32.totalorder %s79, %s80
      %p91 = scmp.eq.s32.totalorder %s31, 0
      %p92 = por %p90, %p91
      %p93 = scmp.ne.s32.totalorder %s79, %s80
      %p94 = scmp.eq.s32.totalorder %s32, 1
      %p95 = por %p93, %p94
      %p97 = scmp.ne.s32.totalorder %s80, %s96
      %p98 = scmp.eq.s32.totalorder %s32, 0
      %p99 = por %p97, %p98
      %s101 = sadd.s32 %s100, 1
      %p104 = scmp.eq.s32.totalorder %s26, 1
      %p105 = scmp.ne.s32.totalorder %s100, %s102
      %p106 = scmp.eq.s32.totalorder %s26, 0
      %p107 = por %p105, %p106
      %p108 = scmp.ne.s32.totalorder %s100, %s102
      %p109 = scmp.eq.s32.totalorder %s31, 1
      %p110 = por %p108, %p109
      %p111 = scmp.ne.s32.totalorder %s102, %s103
      %p112 = scmp.eq.s32.totalorder %s31, 0
      %p113 = por %p111, %p112
      %p114 = scmp.ne.s32.totalorder %s102, %s103
      %p115 = scmp.eq.s32.totalorder %s32, 1
      %p116 = por %p114, %p115
      %p118 = scmp.ne.s32.totalorder %s103, %s117
      %p119 = scmp.eq.s32.totalorder %s32, 0
      %p120 = por %p118, %p119
      %s122 = sadd.s32 %s121, 1
      %p125 = scmp.eq.s32.totalorder %s26, 1
      %p126 = scmp.ne.s32.totalorder %s121, %s123
      %p127 = scmp.eq.s32.totalorder %s26, 0
      %p128 = por %p126, %p127
      %p129 = scmp.ne.s32.totalorder %s121, %s123
      %p130 = scmp.eq.s32.totalorder %s31, 1
      %p131 = por %p129, %p130
      %p132 = scmp.ne.s32.totalorder %s123, %s124
      %p133 = scmp.eq.s32.totalorder %s31, 0
      %p134 = por %p132, %p133
      %p135 = scmp.ne.s32.totalorder %s123, %s124
      %p136 = scmp.eq.s32.totalorder %s32, 1
      %p137 = por %p135, %p136
      %p139 = scmp.ne.s32.totalorder %s124, %s138
      %p140 = scmp.eq.s32.totalorder %s32, 0
      %p141 = por %p139, %p140
      %s142 = ssub.s32 %s33, %s45
      %p143 = scmp.eq.s32.totalorder %s142, 0
      %s145 = sadd.s32 %s144, 1
      %s146 = scalar_select %p143, %s144, %s145
      %p149 = pneg %p143
      %p150 = scmp.eq.s32.totalorder %s26, 1
      %p151 = por %p149, %p150
      %p152 = scmp.ne.s32.totalorder %s144, %s147
      %p153 = scmp.eq.s32.totalorder %s26, 0
      %p154 = por %p152, %p153
      %p155 = scmp.ne.s32.totalorder %s144, %s147
      %p156 = scmp.eq.s32.totalorder %s31, 1
      %p157 = por %p155, %p156
      %p158 = scmp.ne.s32.totalorder %s147, %s148
      %p159 = scmp.eq.s32.totalorder %s31, 0
      %p160 = por %p158, %p159
      %p161 = scmp.ne.s32.totalorder %s147, %s148
      %p162 = scmp.eq.s32.totalorder %s32, 1
      %p163 = por %p161, %p162
      %p165 = scmp.ne.s32.totalorder %s148, %s164
      %p166 = scmp.eq.s32.totalorder %s32, 0
      %p167 = por %p165, %p166
      %p168 = scmp.le.s32.totalorder 1, %s26
      %p169 = scmp.lt.s32.totalorder %s26, 3
      %p170 = pnand %p168, %p169
      %p171 = pneg %p170
      // Predicated region
      $region9: #{tpu_custom_call.1} parent=5 // pred_check
        _
      $region10: #{tpu_custom_call.1} parent=5 // pred_check_branch
        %173 = sbr.rel (%p170) target = $region12
      $region11: #{tpu_custom_call.1} parent=5 // pred_region
        %s174 = ssub.s32 %s26, 1
        // Predicated region
        $region13: #{tpu_custom_call.1} parent=11 // pred_check
          %p175 = pneg %p92
        $region14: #{tpu_custom_call.1} parent=11 // pred_check_branch
          %177 = sbr.rel (%p175) target = $region16
        $region15: #{tpu_custom_call.1} parent=11 // pred_region
          %s178 = smul.u32 32, %s36
          %180 = vsyncadd [#allocation9], 0
          %s181 = smul.addr %s178, 4
          %s182 = scalar_lea.hbm %s2, %s181
          %s183 = sshll.u32 %s182, 4
          %s184 = int_to_ptr.hbm [resolvable:$true] %s183
          %s185 = sshll.u32 [#allocation8], 4
          %s186 = int_to_ptr.vmem [resolvable:$true] %s185
          %191 = dma.hbm_to_vmem [thread:$0]  %s184, 2048, %s186, [#allocation9], 64, 64, 4
        $region16: #{tpu_custom_call.1} parent=11 // pred_fallthru
          _
        // Predicated region
        $region17: #{tpu_custom_call.1} parent=11 // pred_check
          %p192 = pneg %p113
        $region18: #{tpu_custom_call.1} parent=11 // pred_check_branch
          %194 = sbr.rel (%p192) target = $region20
        $region19: #{tpu_custom_call.1} parent=11 // pred_region
          %196 = vsyncadd [#allocation9], 0
          %s197 = sshll.u32 %s3, 4
          %s198 = int_to_ptr.hbm [resolvable:$true] %s197
          %s199 = sshll.u32 [#allocation10], 4
          %s200 = int_to_ptr.vmem [resolvable:$true] %s199
          %205 = dma.hbm_to_vmem [thread:$0]  %s198, 1024, %s200, [#allocation9], 64, 64, 4
        $region20: #{tpu_custom_call.1} parent=11 // pred_fallthru
          _
        // Predicated region
        $region21: #{tpu_custom_call.1} parent=11 // pred_check
          %p206 = pneg %p134
        $region22: #{tpu_custom_call.1} parent=11 // pred_check_branch
          %208 = sbr.rel (%p206) target = $region24
        $region23: #{tpu_custom_call.1} parent=11 // pred_region
          _
        $region24: #{tpu_custom_call.1} parent=11 // pred_fallthru
          _
      $region12: #{tpu_custom_call.1} parent=5 // pred_fallthru
        _
      %p209 = scmp.lt.s32.totalorder %s26, 2
      // Predicated region
      $region25: #{tpu_custom_call.1} parent=5 // pred_check
        %p210 = pneg %p209
      $region26: #{tpu_custom_call.1} parent=5 // pred_check_branch
        %212 = sbr.rel (%p210) target = $region28
      $region27: #{tpu_custom_call.1} parent=5 // pred_region
        // Predicated region
        $region29: #{tpu_custom_call.1} parent=27 // pred_check
          %p213 = pneg %p60
        $region30: #{tpu_custom_call.1} parent=27 // pred_check_branch
          %215 = sbr.rel (%p213) target = $region32
        $region31: #{tpu_custom_call.1} parent=27 // pred_region
          %s216 = sand.u32 %s50, 1
          %s217 = scalar_lea.sflag [#allocation6], %s216
          %s218 = sand.u32 %s50, 1
          %s219 = smul.addr %s218, 128
          %s220 = scalar_lea.vmem [#allocation5], %s219
          %s221 = smul.u32 16, %s33
          %s222 = smul.u32 2, %s34
          %224 = vsyncadd %s217, 0
          %s225 = smul.addr %s221, 2
          %s226 = sadd.s32 %s222, %s225
          %s227 = smul.addr %s226, 4
          %s228 = scalar_lea.hbm %s1, %s227
          %s229 = sshll.u32 %s228, 4
          %s230 = int_to_ptr.hbm [resolvable:$true] %s229
          %s231 = sshll.u32 %s220, 4
          %s232 = int_to_ptr.vmem [resolvable:$true] %s231
          %237 = dma.hbm_to_vmem [thread:$0]  %s230, 2048, %s232, %s217, 128, 128, 8
        $region32: #{tpu_custom_call.1} parent=27 // pred_fallthru
          _
      $region28: #{tpu_custom_call.1} parent=5 // pred_fallthru
        _
      %p238 = scmp.le.s32.totalorder 1, %s26
      %p239 = scmp.lt.s32.totalorder %s26, 3
      %p240 = pnand %p238, %p239
      %p241 = pneg %p240
      // Predicated region
      $region33: #{tpu_custom_call.1} parent=5 // pred_check
        _
      $region34: #{tpu_custom_call.1} parent=5 // pred_check_branch
        %243 = sbr.rel (%p240) target = $region36
      $region35: #{tpu_custom_call.1} parent=5 // pred_region
        %s244 = ssub.s32 %s26, 1
        %s245 = sand.u32 %s53, 1
        %s246 = scalar_lea.sflag [#allocation6], %s245
        %s247 = sand.u32 %s53, 1
        %s248 = smul.addr %s247, 128
        %s249 = scalar_lea.vmem [#allocation5], %s248
        // Predicated region
        $region37: #{tpu_custom_call.1} parent=35 // pred_check
          %p250 = pneg %p66
        $region38: #{tpu_custom_call.1} parent=35 // pred_check_branch
          %252 = sbr.rel (%p250) target = $region40
        $region39: #{tpu_custom_call.1} parent=35 // pred_region
          %254 = dma.done %s246, 2048
        $region40: #{tpu_custom_call.1} parent=35 // pred_fallthru
          _
        // Predicated region
        $region41: #{tpu_custom_call.1} parent=35 // pred_check
          %p255 = pneg %p92
        $region42: #{tpu_custom_call.1} parent=35 // pred_check_branch
          %257 = sbr.rel (%p255) target = $region44
        $region43: #{tpu_custom_call.1} parent=35 // pred_region
          %259 = dma.done [#allocation9], 2048
        $region44: #{tpu_custom_call.1} parent=35 // pred_fallthru
          _
        // Predicated region
        $region45: #{tpu_custom_call.1} parent=35 // pred_check
          %p260 = pneg %p113
        $region46: #{tpu_custom_call.1} parent=35 // pred_check_branch
          %262 = sbr.rel (%p260) target = $region48
        $region47: #{tpu_custom_call.1} parent=35 // pred_region
          %264 = dma.done [#allocation9], 1024
        $region48: #{tpu_custom_call.1} parent=35 // pred_fallthru
          _
        %s265 = sand.u32 %s53, 1
        %s266 = scalar_lea.sflag [#allocation6], %s265
        %s267 = sand.u32 %s53, 1
        %s268 = smul.addr %s267, 128
        %s269 = scalar_lea.vmem [#allocation5], %s268
        %p270 = pneg %p66
        %p271 = pneg %p63
        %p272 = pneg %p92
        %p273 = pneg %p89
        %p274 = pneg %p113
        %p275 = pneg %p110
        %p276 = pneg %p134
        %p277 = pneg %p131
        %p278 = pneg %p160
        %p279 = pneg %p157
        %s280 = sand.u32 %s147, 1
        %s281 = scalar_lea.sflag [#allocation7], %s280
        %s282 = sand.u32 %s147, 1
        %s283 = smul.addr %s282, 128
        %s284 = scalar_lea.vmem [#allocation11], %s283
        %s285 = smul.u32 16, %s35
        %s286 = smul.u32 2, %s36
        %s287 = smul.u32 32, %s36
        %s288 = smul.u32 16, %s35
        %p289 = scmp.eq.s32.totalorder %s36, 0
        // Predicated region
        $region49: #{tpu_custom_call.1} parent=35 // pred_check
          %p290 = pneg %p289
        $region50: #{tpu_custom_call.1} parent=35 // pred_check_branch
          %292 = sbr.rel (%p290) target = $region52
        $region51: #{tpu_custom_call.1} parent=35 // pred_region
          %293 = vst [vmem:[#allocation2] sm:$0xff] 0.0
          %294 = vst [vmem:[#allocation2 + $0x8] sm:$0xff] 0.0
          %295 = vst [vmem:[#allocation2 + $0x10] sm:$0xff] 0.0
          %296 = vst [vmem:[#allocation2 + $0x18] sm:$0xff] 0.0
          %297 = vst [vmem:[#allocation2 + $0x20] sm:$0xff] 0.0
          %298 = vst [vmem:[#allocation2 + $0x28] sm:$0xff] 0.0
          %299 = vst [vmem:[#allocation2 + $0x30] sm:$0xff] 0.0
          %300 = vst [vmem:[#allocation2 + $0x38] sm:$0xff] 0.0
          %301 = vst [vmem:[#allocation2 + $0x40] sm:$0xff] 0.0
          %302 = vst [vmem:[#allocation2 + $0x48] sm:$0xff] 0.0
          %303 = vst [vmem:[#allocation2 + $0x50] sm:$0xff] 0.0
          %304 = vst [vmem:[#allocation2 + $0x58] sm:$0xff] 0.0
          %305 = vst [vmem:[#allocation2 + $0x60] sm:$0xff] 0.0
          %306 = vst [vmem:[#allocation2 + $0x68] sm:$0xff] 0.0
          %307 = vst [vmem:[#allocation2 + $0x70] sm:$0xff] 0.0
          %308 = vst [vmem:[#allocation2 + $0x78] sm:$0xff] 0.0
        $region52: #{tpu_custom_call.1} parent=35 // pred_fallthru
          _
        %s309 = sshra.s32 %s36, 7
        %s310 = sand.u32 %s36, 127
        %s311 = sadd.s32 %s309, %s35
        %s312 = smul.u32 %s311, 128
        %s313 = sshra.s32 %s36, 7
        %s314 = sand.u32 %s36, 127
        %s315 = sadd.s32 %s312, %s314
        %s316 = sld [smem:[#allocation4 + %s315]]
        %p317 = scmp.ne.s32.totalorder %s316, 0
        // Predicated region
        $region53: #{tpu_custom_call.1} parent=35 // pred_check
          %p318 = pneg %p317
        $region54: #{tpu_custom_call.1} parent=35 // pred_check_branch
          %320 = sbr.rel (%p318) target = $region56
        $region55: #{tpu_custom_call.1} parent=35 // pred_region
          %v321 = vld [vmem:[#allocation8] sm:$0xf]
          %v322 = vld [vmem:[#allocation8 + $0x4] sm:$0xf]
          %v323 = vld [vmem:[#allocation8 + $0x8] sm:$0xf]
          %v324 = vld [vmem:[#allocation8 + $0xc] sm:$0xf]
          %v325 = vld [vmem:[#allocation8 + $0x10] sm:$0xf]
          %v326 = vld [vmem:[#allocation8 + $0x14] sm:$0xf]
          %v327 = vld [vmem:[#allocation8 + $0x18] sm:$0xf]
          %v328 = vld [vmem:[#allocation8 + $0x1c] sm:$0xf]
          %v329 = vld [vmem:[#allocation8 + $0x20] sm:$0xf]
          %v330 = vld [vmem:[#allocation8 + $0x24] sm:$0xf]
          %v331 = vld [vmem:[#allocation8 + $0x28] sm:$0xf]
          %v332 = vld [vmem:[#allocation8 + $0x2c] sm:$0xf]
          %v333 = vld [vmem:[#allocation8 + $0x30] sm:$0xf]
          %v334 = vld [vmem:[#allocation8 + $0x34] sm:$0xf]
          %v335 = vld [vmem:[#allocation8 + $0x38] sm:$0xf]
          %v336 = vld [vmem:[#allocation8 + $0x3c] sm:$0xf]
          %v337 = vld [vmem:[#allocation8 + $0x40] sm:$0xf]
          %v338 = vld [vmem:[#allocation8 + $0x44] sm:$0xf]
          %v339 = vld [vmem:[#allocation8 + $0x48] sm:$0xf]
          %v340 = vld [vmem:[#allocation8 + $0x4c] sm:$0xf]
          %v341 = vld [vmem:[#allocation8 + $0x50] sm:$0xf]
          %v342 = vld [vmem:[#allocation8 + $0x54] sm:$0xf]
          %v343 = vld [vmem:[#allocation8 + $0x58] sm:$0xf]
          %v344 = vld [vmem:[#allocation8 + $0x5c] sm:$0xf]
          %v345 = vld [vmem:[#allocation8 + $0x60] sm:$0xf]
          %v346 = vld [vmem:[#allocation8 + $0x64] sm:$0xf]
          %v347 = vld [vmem:[#allocation8 + $0x68] sm:$0xf]
          %v348 = vld [vmem:[#allocation8 + $0x6c] sm:$0xf]
          %v349 = vld [vmem:[#allocation8 + $0x70] sm:$0xf]
          %v350 = vld [vmem:[#allocation8 + $0x74] sm:$0xf]
          %v351 = vld [vmem:[#allocation8 + $0x78] sm:$0xf]
          %v352 = vld [vmem:[#allocation8 + $0x7c] sm:$0xf]
          %v353 = vld [vmem:[#allocation10] sm:$0xf]
          %v354 = vld [vmem:[#allocation10 + $0x4] sm:$0xf]
          %v355 = vld [vmem:[#allocation10 + $0x8] sm:$0xf]
          %v356 = vld [vmem:[#allocation10 + $0xc] sm:$0xf]
          %v357 = vld [vmem:[#allocation10 + $0x10] sm:$0xf]
          %v358 = vld [vmem:[#allocation10 + $0x14] sm:$0xf]
          %v359 = vld [vmem:[#allocation10 + $0x18] sm:$0xf]
          %v360 = vld [vmem:[#allocation10 + $0x1c] sm:$0xf]
          %v361 = vld [vmem:[#allocation10 + $0x20] sm:$0xf]
          %v362 = vld [vmem:[#allocation10 + $0x24] sm:$0xf]
          %v363 = vld [vmem:[#allocation10 + $0x28] sm:$0xf]
          %v364 = vld [vmem:[#allocation10 + $0x2c] sm:$0xf]
          %v365 = vld [vmem:[#allocation10 + $0x30] sm:$0xf]
          %v366 = vld [vmem:[#allocation10 + $0x34] sm:$0xf]
          %v367 = vld [vmem:[#allocation10 + $0x38] sm:$0xf]
          %v368 = vld [vmem:[#allocation10 + $0x3c] sm:$0xf]
          %v401 = vunpack.c.l.b16 %v321
          %v402 = vunpack.c.l.b16 %v322
          %v403 = vunpack.c.l.b16 %v323
          %v404 = vunpack.c.l.b16 %v324
          %v405 = vunpack.c.l.b16 %v325
          %v406 = vunpack.c.l.b16 %v326
          %v407 = vunpack.c.l.b16 %v327
          %v408 = vunpack.c.l.b16 %v328
          %v409 = vunpack.c.l.b16 %v329
          %v410 = vunpack.c.l.b16 %v330
          %v411 = vunpack.c.l.b16 %v331
          %v412 = vunpack.c.l.b16 %v332
          %v413 = vunpack.c.l.b16 %v333
          %v414 = vunpack.c.l.b16 %v334
          %v415 = vunpack.c.l.b16 %v335
          %v416 = vunpack.c.l.b16 %v336
          %v417 = vunpack.c.l.b16 %v337
          %v418 = vunpack.c.l.b16 %v338
          %v419 = vunpack.c.l.b16 %v339
          %v420 = vunpack.c.l.b16 %v340
          %v421 = vunpack.c.l.b16 %v341
          %v422 = vunpack.c.l.b16 %v342
          %v423 = vunpack.c.l.b16 %v343
          %v424 = vunpack.c.l.b16 %v344
          %v425 = vunpack.c.l.b16 %v345
          %v426 = vunpack.c.l.b16 %v346
          %v427 = vunpack.c.l.b16 %v347
          %v428 = vunpack.c.l.b16 %v348
          %v429 = vunpack.c.l.b16 %v349
          %v430 = vunpack.c.l.b16 %v350
          %v431 = vunpack.c.l.b16 %v351
          %v432 = vunpack.c.l.b16 %v352
          %v433 = vpack.c.b16 %v402, %v401
          %v434 = vpack.c.b16 %v404, %v403
          %v435 = vpack.c.b16 %v406, %v405
          %v436 = vpack.c.b16 %v408, %v407
          %v437 = vpack.c.b16 %v410, %v409
          %v438 = vpack.c.b16 %v412, %v411
          %v439 = vpack.c.b16 %v414, %v413
          %v440 = vpack.c.b16 %v416, %v415
          %v441 = vpack.c.b16 %v418, %v417
          %v442 = vpack.c.b16 %v420, %v419
          %v443 = vpack.c.b16 %v422, %v421
          %v444 = vpack.c.b16 %v424, %v423
          %v445 = vpack.c.b16 %v426, %v425
          %v446 = vpack.c.b16 %v428, %v427
          %v447 = vpack.c.b16 %v430, %v429
          %v448 = vpack.c.b16 %v432, %v431
          %v481 = vunpack.c.l.b16 %v353
          %v482 = vunpack.c.l.b16 %v354
          %v483 = vunpack.c.l.b16 %v355
          %v484 = vunpack.c.l.b16 %v356
          %v485 = vunpack.c.l.b16 %v357
          %v486 = vunpack.c.l.b16 %v358
          %v487 = vunpack.c.l.b16 %v359
          %v488 = vunpack.c.l.b16 %v360
          %v489 = vunpack.c.l.b16 %v361
          %v490 = vunpack.c.l.b16 %v362
          %v491 = vunpack.c.l.b16 %v363
          %v492 = vunpack.c.l.b16 %v364
          %v493 = vunpack.c.l.b16 %v365
          %v494 = vunpack.c.l.b16 %v366
          %v495 = vunpack.c.l.b16 %v367
          %v496 = vunpack.c.l.b16 %v368
          %v497 = vpack.c.b16 %v482, %v481
          %v498 = vpack.c.b16 %v484, %v483
          %v499 = vpack.c.b16 %v486, %v485
          %v500 = vpack.c.b16 %v488, %v487
          %v501 = vpack.c.b16 %v490, %v489
          %v502 = vpack.c.b16 %v492, %v491
          %v503 = vpack.c.b16 %v494, %v493
          %v504 = vpack.c.b16 %v496, %v495
          %513 = vmatpush.bf16.msra.mxu0 %v504
          %514 = vmatpush.bf16.msra.mxu0 %v503
          %515 = vmatpush.bf16.msra.mxu0 %v502
          %516 = vmatpush.bf16.msra.mxu0 %v501
          %517 = vmatpush.bf16.msra.mxu0 %v500
          %518 = vmatpush.bf16.msra.mxu0 %v499
          %519 = vmatpush.bf16.msra.mxu0 %v498
          %520 = vmatpush.bf16.msra.mxu0 %v497
          %521 = vmatmul.bf16.gmra.mxu0 %v433
          %v522 = vpop.f32.mrf.mxu0
          %v523 = vadd.f32 0.0, %v522
          %v524 = vpop.f32.mrf.mxu0
          %v525 = vadd.f32 0.0, %v524
          %526 = vmatmul.bf16.gmra.mxu0 %v434
          %v527 = vpop.f32.mrf.mxu0
          %v528 = vadd.f32 0.0, %v527
          %v529 = vpop.f32.mrf.mxu0
          %v530 = vadd.f32 0.0, %v529
          %531 = vmatmul.bf16.gmra.mxu0 %v435
          %v532 = vpop.f32.mrf.mxu0
          %v533 = vadd.f32 0.0, %v532
          %v534 = vpop.f32.mrf.mxu0
          %v535 = vadd.f32 0.0, %v534
          %536 = vmatmul.bf16.gmra.mxu0 %v436
          %v537 = vpop.f32.mrf.mxu0
          %v538 = vadd.f32 0.0, %v537
          %v539 = vpop.f32.mrf.mxu0
          %v540 = vadd.f32 0.0, %v539
          %541 = vmatmul.bf16.gmra.mxu0 %v437
          %v542 = vpop.f32.mrf.mxu0
          %v543 = vadd.f32 0.0, %v542
          %v544 = vpop.f32.mrf.mxu0
          %v545 = vadd.f32 0.0, %v544
          %546 = vmatmul.bf16.gmra.mxu0 %v438
          %v547 = vpop.f32.mrf.mxu0
          %v548 = vadd.f32 0.0, %v547
          %v549 = vpop.f32.mrf.mxu0
          %v550 = vadd.f32 0.0, %v549
          %551 = vmatmul.bf16.gmra.mxu0 %v439
          %v552 = vpop.f32.mrf.mxu0
          %v553 = vadd.f32 0.0, %v552
          %v554 = vpop.f32.mrf.mxu0
          %v555 = vadd.f32 0.0, %v554
          %556 = vmatmul.bf16.gmra.mxu0 %v440
          %v557 = vpop.f32.mrf.mxu0
          %v558 = vadd.f32 0.0, %v557
          %v559 = vpop.f32.mrf.mxu0
          %v560 = vadd.f32 0.0, %v559
          %561 = vmatmul.bf16.gmra.mxu0 %v441
          %v562 = vpop.f32.mrf.mxu0
          %v563 = vadd.f32 0.0, %v562
          %v564 = vpop.f32.mrf.mxu0
          %v565 = vadd.f32 0.0, %v564
          %566 = vmatmul.bf16.gmra.mxu0 %v442
          %v567 = vpop.f32.mrf.mxu0
          %v568 = vadd.f32 0.0, %v567
          %v569 = vpop.f32.mrf.mxu0
          %v570 = vadd.f32 0.0, %v569
          %571 = vmatmul.bf16.gmra.mxu0 %v443
          %v572 = vpop.f32.mrf.mxu0
          %v573 = vadd.f32 0.0, %v572
          %v574 = vpop.f32.mrf.mxu0
          %v575 = vadd.f32 0.0, %v574
          %576 = vmatmul.bf16.gmra.mxu0 %v444
          %v577 = vpop.f32.mrf.mxu0
          %v578 = vadd.f32 0.0, %v577
          %v579 = vpop.f32.mrf.mxu0
          %v580 = vadd.f32 0.0, %v579
          %581 = vmatmul.bf16.gmra.mxu0 %v445
          %v582 = vpop.f32.mrf.mxu0
          %v583 = vadd.f32 0.0, %v582
          %v584 = vpop.f32.mrf.mxu0
          %v585 = vadd.f32 0.0, %v584
          %586 = vmatmul.bf16.gmra.mxu0 %v446
          %v587 = vpop.f32.mrf.mxu0
          %v588 = vadd.f32 0.0, %v587
          %v589 = vpop.f32.mrf.mxu0
          %v590 = vadd.f32 0.0, %v589
          %591 = vmatmul.bf16.gmra.mxu0 %v447
          %v592 = vpop.f32.mrf.mxu0
          %v593 = vadd.f32 0.0, %v592
          %v594 = vpop.f32.mrf.mxu0
          %v595 = vadd.f32 0.0, %v594
          %596 = vmatmul.bf16.gmra.mxu0 %v448
          %v597 = vpop.f32.mrf.mxu0
          %v598 = vadd.f32 0.0, %v597
          %v599 = vpop.f32.mrf.mxu0
          %v600 = vadd.f32 0.0, %v599
          %601 = vdwg.mxu0
          %v602 = vld [vmem:[#allocation2] sm:$0xff]
          %v603 = vld [vmem:[#allocation2 + $0x8] sm:$0xff]
          %v604 = vld [vmem:[#allocation2 + $0x10] sm:$0xff]
          %v605 = vld [vmem:[#allocation2 + $0x18] sm:$0xff]
          %v606 = vld [vmem:[#allocation2 + $0x20] sm:$0xff]
          %v607 = vld [vmem:[#allocation2 + $0x28] sm:$0xff]
          %v608 = vld [vmem:[#allocation2 + $0x30] sm:$0xff]
          %v609 = vld [vmem:[#allocation2 + $0x38] sm:$0xff]
          %v610 = vld [vmem:[#allocation2 + $0x40] sm:$0xff]
          %v611 = vld [vmem:[#allocation2 + $0x48] sm:$0xff]
          %v612 = vld [vmem:[#allocation2 + $0x50] sm:$0xff]
          %v613 = vld [vmem:[#allocation2 + $0x58] sm:$0xff]
          %v614 = vld [vmem:[#allocation2 + $0x60] sm:$0xff]
          %v615 = vld [vmem:[#allocation2 + $0x68] sm:$0xff]
          %v616 = vld [vmem:[#allocation2 + $0x70] sm:$0xff]
          %v617 = vld [vmem:[#allocation2 + $0x78] sm:$0xff]
          %v618 = vld [vmem:[%s249] sm:$0xff]
          %v619 = vld [vmem:[%s249 + $0x8] sm:$0xff]
          %v620 = vld [vmem:[%s249 + $0x10] sm:$0xff]
          %v621 = vld [vmem:[%s249 + $0x18] sm:$0xff]
          %v622 = vld [vmem:[%s249 + $0x20] sm:$0xff]
          %v623 = vld [vmem:[%s249 + $0x28] sm:$0xff]
          %v624 = vld [vmem:[%s249 + $0x30] sm:$0xff]
          %v625 = vld [vmem:[%s249 + $0x38] sm:$0xff]
          %v626 = vld [vmem:[%s249 + $0x40] sm:$0xff]
          %v627 = vld [vmem:[%s249 + $0x48] sm:$0xff]
          %v628 = vld [vmem:[%s249 + $0x50] sm:$0xff]
          %v629 = vld [vmem:[%s249 + $0x58] sm:$0xff]
          %v630 = vld [vmem:[%s249 + $0x60] sm:$0xff]
          %v631 = vld [vmem:[%s249 + $0x68] sm:$0xff]
          %v632 = vld [vmem:[%s249 + $0x70] sm:$0xff]
          %v633 = vld [vmem:[%s249 + $0x78] sm:$0xff]
          %v634 = vpack.c.bf16 %v525, %v523
          %v635 = vpack.c.bf16 %v530, %v528
          %v636 = vpack.c.bf16 %v535, %v533
          %v637 = vpack.c.bf16 %v540, %v538
          %v638 = vpack.c.bf16 %v545, %v543
          %v639 = vpack.c.bf16 %v550, %v548
          %v640 = vpack.c.bf16 %v555, %v553
          %v641 = vpack.c.bf16 %v560, %v558
          %v642 = vpack.c.bf16 %v565, %v563
          %v643 = vpack.c.bf16 %v570, %v568
          %v644 = vpack.c.bf16 %v575, %v573
          %v645 = vpack.c.bf16 %v580, %v578
          %v646 = vpack.c.bf16 %v585, %v583
          %v647 = vpack.c.bf16 %v590, %v588
          %v648 = vpack.c.bf16 %v595, %v593
          %v649 = vpack.c.bf16 %v600, %v598
          %v666 = vunpack.c.l.b16 %v618
          %v667 = vunpack.c.h.b16 %v618
          %v668 = vunpack.c.l.b16 %v619
          %v669 = vunpack.c.h.b16 %v619
          %v670 = vunpack.c.l.b16 %v620
          %v671 = vunpack.c.h.b16 %v620
          %v672 = vunpack.c.l.b16 %v621
          %v673 = vunpack.c.h.b16 %v621
          %v674 = vunpack.c.l.b16 %v622
          %v675 = vunpack.c.h.b16 %v622
          %v676 = vunpack.c.l.b16 %v623
          %v677 = vunpack.c.h.b16 %v623
          %v678 = vunpack.c.l.b16 %v624
          %v679 = vunpack.c.h.b16 %v624
          %v680 = vunpack.c.l.b16 %v625
          %v681 = vunpack.c.h.b16 %v625
          %v682 = vunpack.c.l.b16 %v626
          %v683 = vunpack.c.h.b16 %v626
          %v684 = vunpack.c.l.b16 %v627
          %v685 = vunpack.c.h.b16 %v627
          %v686 = vunpack.c.l.b16 %v628
          %v687 = vunpack.c.h.b16 %v628
          %v688 = vunpack.c.l.b16 %v629
          %v689 = vunpack.c.h.b16 %v629
          %v690 = vunpack.c.l.b16 %v630
          %v691 = vunpack.c.h.b16 %v630
          %v692 = vunpack.c.l.b16 %v631
          %v693 = vunpack.c.h.b16 %v631
          %v694 = vunpack.c.l.b16 %v632
          %v695 = vunpack.c.h.b16 %v632
          %v696 = vunpack.c.l.b16 %v633
          %v697 = vunpack.c.h.b16 %v633
          %v698 = vpack.c.b16 %v668, %v666
          %v699 = vpack.c.b16 %v669, %v667
          %v700 = vpack.c.b16 %v672, %v670
          %v701 = vpack.c.b16 %v673, %v671
          %v702 = vpack.c.b16 %v676, %v674
          %v703 = vpack.c.b16 %v677, %v675
          %v704 = vpack.c.b16 %v680, %v678
          %v705 = vpack.c.b16 %v681, %v679
          %v706 = vpack.c.b16 %v684, %v682
          %v707 = vpack.c.b16 %v685, %v683
          %v708 = vpack.c.b16 %v688, %v686
          %v709 = vpack.c.b16 %v689, %v687
          %v710 = vpack.c.b16 %v692, %v690
          %v711 = vpack.c.b16 %v693, %v691
          %v712 = vpack.c.b16 %v696, %v694
          %v713 = vpack.c.b16 %v697, %v695
          %730 = vmatpush.bf16.msra.mxu0 %v641
          %731 = vmatpush.bf16.msra.mxu0 %v640
          %732 = vmatpush.bf16.msra.mxu0 %v639
          %733 = vmatpush.bf16.msra.mxu0 %v638
          %734 = vmatpush.bf16.msra.mxu0 %v637
          %735 = vmatpush.bf16.msra.mxu0 %v636
          %736 = vmatpush.bf16.msra.mxu0 %v635
          %737 = vmatpush.bf16.msra.mxu0 %v634
          %738 = vmatmul.bf16.gmra.mxu0 %v698
          %v739 = vpop.f32.mrf.mxu0
          %v740 = vadd.f32 0.0, %v739
          %v741 = vpop.f32.mrf.mxu0
          %v742 = vadd.f32 0.0, %v741
          %743 = vmatmul.bf16.gmra.mxu0 %v700
          %v744 = vpop.f32.mrf.mxu0
          %v745 = vadd.f32 0.0, %v744
          %v746 = vpop.f32.mrf.mxu0
          %v747 = vadd.f32 0.0, %v746
          %748 = vmatmul.bf16.gmra.mxu0 %v702
          %v749 = vpop.f32.mrf.mxu0
          %v750 = vadd.f32 0.0, %v749
          %v751 = vpop.f32.mrf.mxu0
          %v752 = vadd.f32 0.0, %v751
          %753 = vmatmul.bf16.gmra.mxu0 %v704
          %v754 = vpop.f32.mrf.mxu0
          %v755 = vadd.f32 0.0, %v754
          %v756 = vpop.f32.mrf.mxu0
          %v757 = vadd.f32 0.0, %v756
          %758 = vmatmul.bf16.gmra.mxu0 %v706
          %v759 = vpop.f32.mrf.mxu0
          %v760 = vadd.f32 0.0, %v759
          %v761 = vpop.f32.mrf.mxu0
          %v762 = vadd.f32 0.0, %v761
          %763 = vmatmul.bf16.gmra.mxu0 %v708
          %v764 = vpop.f32.mrf.mxu0
          %v765 = vadd.f32 0.0, %v764
          %v766 = vpop.f32.mrf.mxu0
          %v767 = vadd.f32 0.0, %v766
          %768 = vmatmul.bf16.gmra.mxu0 %v710
          %v769 = vpop.f32.mrf.mxu0
          %v770 = vadd.f32 0.0, %v769
          %v771 = vpop.f32.mrf.mxu0
          %v772 = vadd.f32 0.0, %v771
          %773 = vmatmul.bf16.gmra.mxu0 %v712
          %v774 = vpop.f32.mrf.mxu0
          %v775 = vadd.f32 0.0, %v774
          %v776 = vpop.f32.mrf.mxu0
          %v777 = vadd.f32 0.0, %v776
          %778 = vdwg.mxu0
          %779 = vmatpush.bf16.msra.mxu0 %v649
          %780 = vmatpush.bf16.msra.mxu0 %v648
          %781 = vmatpush.bf16.msra.mxu0 %v647
          %782 = vmatpush.bf16.msra.mxu0 %v646
          %783 = vmatpush.bf16.msra.mxu0 %v645
          %784 = vmatpush.bf16.msra.mxu0 %v644
          %785 = vmatpush.bf16.msra.mxu0 %v643
          %786 = vmatpush.bf16.msra.mxu0 %v642
          %787 = vmatmul.bf16.gmra.mxu0 %v699
          %v788 = vpop.f32.mrf.mxu0
          %v789 = vadd.f32 %v740, %v788
          %v790 = vpop.f32.mrf.mxu0
          %v791 = vadd.f32 %v742, %v790
          %792 = vmatmul.bf16.gmra.mxu0 %v701
          %v793 = vpop.f32.mrf.mxu0
          %v794 = vadd.f32 %v745, %v793
          %v795 = vpop.f32.mrf.mxu0
          %v796 = vadd.f32 %v747, %v795
          %797 = vmatmul.bf16.gmra.mxu0 %v703
          %v798 = vpop.f32.mrf.mxu0
          %v799 = vadd.f32 %v750, %v798
          %v800 = vpop.f32.mrf.mxu0
          %v801 = vadd.f32 %v752, %v800
          %802 = vmatmul.bf16.gmra.mxu0 %v705
          %v803 = vpop.f32.mrf.mxu0
          %v804 = vadd.f32 %v755, %v803
          %v805 = vpop.f32.mrf.mxu0
          %v806 = vadd.f32 %v757, %v805
          %807 = vmatmul.bf16.gmra.mxu0 %v707
          %v808 = vpop.f32.mrf.mxu0
          %v809 = vadd.f32 %v760, %v808
          %v810 = vpop.f32.mrf.mxu0
          %v811 = vadd.f32 %v762, %v810
          %812 = vmatmul.bf16.gmra.mxu0 %v709
          %v813 = vpop.f32.mrf.mxu0
          %v814 = vadd.f32 %v765, %v813
          %v815 = vpop.f32.mrf.mxu0
          %v816 = vadd.f32 %v767, %v815
          %817 = vmatmul.bf16.gmra.mxu0 %v711
          %v818 = vpop.f32.mrf.mxu0
          %v819 = vadd.f32 %v770, %v818
          %v820 = vpop.f32.mrf.mxu0
          %v821 = vadd.f32 %v772, %v820
          %822 = vmatmul.bf16.gmra.mxu0 %v713
          %v823 = vpop.f32.mrf.mxu0
          %v824 = vadd.f32 %v775, %v823
          %v825 = vpop.f32.mrf.mxu0
          %v826 = vadd.f32 %v777, %v825
          %827 = vdwg.mxu0
          %v828 = vadd.f32 %v602, %v789
          %v829 = vadd.f32 %v603, %v791
          %v830 = vadd.f32 %v604, %v794
          %v831 = vadd.f32 %v605, %v796
          %v832 = vadd.f32 %v606, %v799
          %v833 = vadd.f32 %v607, %v801
          %v834 = vadd.f32 %v608, %v804
          %v835 = vadd.f32 %v609, %v806
          %v836 = vadd.f32 %v610, %v809
          %v837 = vadd.f32 %v611, %v811
          %v838 = vadd.f32 %v612, %v814
          %v839 = vadd.f32 %v613, %v816
          %v840 = vadd.f32 %v614, %v819
          %v841 = vadd.f32 %v615, %v821
          %v842 = vadd.f32 %v616, %v824
          %v843 = vadd.f32 %v617, %v826
          %844 = vst [vmem:[#allocation2] sm:$0xff] %v828
          %845 = vst [vmem:[#allocation2 + $0x8] sm:$0xff] %v829
          %846 = vst [vmem:[#allocation2 + $0x10] sm:$0xff] %v830
          %847 = vst [vmem:[#allocation2 + $0x18] sm:$0xff] %v831
          %848 = vst [vmem:[#allocation2 + $0x20] sm:$0xff] %v832
          %849 = vst [vmem:[#allocation2 + $0x28] sm:$0xff] %v833
          %850 = vst [vmem:[#allocation2 + $0x30] sm:$0xff] %v834
          %851 = vst [vmem:[#allocation2 + $0x38] sm:$0xff] %v835
          %852 = vst [vmem:[#allocation2 + $0x40] sm:$0xff] %v836
          %853 = vst [vmem:[#allocation2 + $0x48] sm:$0xff] %v837
          %854 = vst [vmem:[#allocation2 + $0x50] sm:$0xff] %v838
          %855 = vst [vmem:[#allocation2 + $0x58] sm:$0xff] %v839
          %856 = vst [vmem:[#allocation2 + $0x60] sm:$0xff] %v840
          %857 = vst [vmem:[#allocation2 + $0x68] sm:$0xff] %v841
          %858 = vst [vmem:[#allocation2 + $0x70] sm:$0xff] %v842
          %859 = vst [vmem:[#allocation2 + $0x78] sm:$0xff] %v843
        $region56: #{tpu_custom_call.1} parent=35 // pred_fallthru
          _
        // Predicated region
        $region57: #{tpu_custom_call.1} parent=35 // pred_check
          %p860 = pneg %p289
        $region58: #{tpu_custom_call.1} parent=35 // pred_check_branch
          %862 = sbr.rel (%p860) target = $region60
        $region59: #{tpu_custom_call.1} parent=35 // pred_region
          %v863 = vld [vmem:[#allocation2] sm:$0xff]
          %v864 = vld [vmem:[#allocation2 + $0x8] sm:$0xff]
          %v865 = vld [vmem:[#allocation2 + $0x10] sm:$0xff]
          %v866 = vld [vmem:[#allocation2 + $0x18] sm:$0xff]
          %v867 = vld [vmem:[#allocation2 + $0x20] sm:$0xff]
          %v868 = vld [vmem:[#allocation2 + $0x28] sm:$0xff]
          %v869 = vld [vmem:[#allocation2 + $0x30] sm:$0xff]
          %v870 = vld [vmem:[#allocation2 + $0x38] sm:$0xff]
          %v871 = vld [vmem:[#allocation2 + $0x40] sm:$0xff]
          %v872 = vld [vmem:[#allocation2 + $0x48] sm:$0xff]
          %v873 = vld [vmem:[#allocation2 + $0x50] sm:$0xff]
          %v874 = vld [vmem:[#allocation2 + $0x58] sm:$0xff]
          %v875 = vld [vmem:[#allocation2 + $0x60] sm:$0xff]
          %v876 = vld [vmem:[#allocation2 + $0x68] sm:$0xff]
          %v877 = vld [vmem:[#allocation2 + $0x70] sm:$0xff]
          %v878 = vld [vmem:[#allocation2 + $0x78] sm:$0xff]
          %v879 = vld [vmem:[%s4] sm:$0x1]
          %v881 = vperm.slane %v879, 0
          %v883 = vadd.f32 %v863, %v881
          %v884 = vadd.f32 %v864, %v881
          %v885 = vadd.f32 %v865, %v881
          %v886 = vadd.f32 %v866, %v881
          %v887 = vadd.f32 %v867, %v881
          %v888 = vadd.f32 %v868, %v881
          %v889 = vadd.f32 %v869, %v881
          %v890 = vadd.f32 %v870, %v881
          %v891 = vadd.f32 %v871, %v881
          %v892 = vadd.f32 %v872, %v881
          %v893 = vadd.f32 %v873, %v881
          %v894 = vadd.f32 %v874, %v881
          %v895 = vadd.f32 %v875, %v881
          %v896 = vadd.f32 %v876, %v881
          %v897 = vadd.f32 %v877, %v881
          %v898 = vadd.f32 %v878, %v881
          %899 = vst [vmem:[%s284] sm:$0xff] %v883
          %900 = vst [vmem:[%s284 + $0x8] sm:$0xff] %v884
          %901 = vst [vmem:[%s284 + $0x10] sm:$0xff] %v885
          %902 = vst [vmem:[%s284 + $0x18] sm:$0xff] %v886
          %903 = vst [vmem:[%s284 + $0x20] sm:$0xff] %v887
          %904 = vst [vmem:[%s284 + $0x28] sm:$0xff] %v888
          %905 = vst [vmem:[%s284 + $0x30] sm:$0xff] %v889
          %906 = vst [vmem:[%s284 + $0x38] sm:$0xff] %v890
          %907 = vst [vmem:[%s284 + $0x40] sm:$0xff] %v891
          %908 = vst [vmem:[%s284 + $0x48] sm:$0xff] %v892
          %909 = vst [vmem:[%s284 + $0x50] sm:$0xff] %v893
          %910 = vst [vmem:[%s284 + $0x58] sm:$0xff] %v894
          %911 = vst [vmem:[%s284 + $0x60] sm:$0xff] %v895
          %912 = vst [vmem:[%s284 + $0x68] sm:$0xff] %v896
          %913 = vst [vmem:[%s284 + $0x70] sm:$0xff] %v897
          %914 = vst [vmem:[%s284 + $0x78] sm:$0xff] %v898
        $region60: #{tpu_custom_call.1} parent=35 // pred_fallthru
          _
        %s915 = sand.u32 %s147, 1
        %s916 = scalar_lea.sflag [#allocation7], %s915
        %s917 = sand.u32 %s147, 1
        %s918 = smul.addr %s917, 128
        %s919 = scalar_lea.vmem [#allocation11], %s918
        // Predicated region
        $region61: #{tpu_custom_call.1} parent=35 // pred_check
          %p920 = pneg %p157
        $region62: #{tpu_custom_call.1} parent=35 // pred_check_branch
          %922 = sbr.rel (%p920) target = $region64
        $region63: #{tpu_custom_call.1} parent=35 // pred_region
          %s923 = smul.u32 16, %s35
          %925 = vsyncadd %s916, 0
          %s926 = smul.addr %s923, 8
          %s927 = scalar_lea.hbm %s5, %s926
          %s928 = sshll.u32 %s919, 4
          %s929 = int_to_ptr.vmem [resolvable:$true] %s928
          %s930 = sshll.u32 %s927, 4
          %s931 = int_to_ptr.hbm [resolvable:$true] %s930
          %936 = dma.vmem_to_hbm [thread:$0]  %s929, 2048, %s931, %s916, 128, 128, 8
        $region64: #{tpu_custom_call.1} parent=35 // pred_fallthru
          _
      $region36: #{tpu_custom_call.1} parent=5 // pred_fallthru
        _
      %p937 = scmp.le.s32.totalorder 2, %s26
      // Predicated region
      $region65: #{tpu_custom_call.1} parent=5 // pred_check
        %p938 = pneg %p937
      $region66: #{tpu_custom_call.1} parent=5 // pred_check_branch
        %940 = sbr.rel (%p938) target = $region68
      $region67: #{tpu_custom_call.1} parent=5 // pred_region
        %s941 = ssub.s32 %s26, 2
        // Predicated region
        $region69: #{tpu_custom_call.1} parent=67 // pred_check
          %p942 = pneg %p163
        $region70: #{tpu_custom_call.1} parent=67 // pred_check_branch
          %944 = sbr.rel (%p942) target = $region72
        $region71: #{tpu_custom_call.1} parent=67 // pred_region
          %s945 = sand.u32 %s148, 1
          %s946 = scalar_lea.sflag [#allocation7], %s945
          %s947 = sand.u32 %s148, 1
          %s948 = smul.addr %s947, 128
          %s949 = scalar_lea.vmem [#allocation11], %s948
          %951 = dma.done %s946, 2048
        $region72: #{tpu_custom_call.1} parent=67 // pred_fallthru
          _
      $region68: #{tpu_custom_call.1} parent=5 // pred_fallthru
        _
    $region6: #{tpu_custom_call.1} parent=1 // loop_footer
      %s30 = sadd.s32 1, %s26
    $region7: #{tpu_custom_call.1} parent=1 // loop_footer_branch
      %25 = sbr.rel target = $region3
    $region8: #{tpu_custom_call.1} parent=1 // loop_exit
      _
    %952 = vsyncpa [#allocation6], 1
    %s953 = scalar_lea.sflag [#allocation6], 1
    %954 = vsyncpa %s953, 1
    %955 = vsyncpa [#allocation9], 1
    %956 = vsyncpa [#allocation7], 1
    %s957 = scalar_lea.sflag [#allocation7], 1
    %958 = vsyncpa %s957, 1

</llo_original>
